<compile_context>
chip_gen: v7x
topology: tpu7x:2x2x1
jax: 0.10.0
libtpu: 0.0.40
codegen_flags: <defaults>
</compile_context>

<pallas_src>
import jax
import jax.numpy as jnp
from jax.experimental import pallas as pl
from jax.experimental.pallas import tpu as pltpu

_MIB = 1024 * 1024


def _round_up(x, m):
    return (x + m - 1) // m * m


def _ffn_kernel(x_ref, w12_ref, w3_ref, o_ref, acc_ref):
    # x_ref  : (tm, E)      row tile, resident across the H-reduction axis j
    # w12_ref: (E, 2*th)    [W1^T tile_j | W2^T tile_j]  (pre-transposed, packed)
    # w3_ref : (th, E)      W3^T tile_j                  (pre-transposed)
    # o_ref  : (tm, E)      output tile (same block across j)
    # acc_ref: (tm, E) f32  accumulator scratch
    j = pl.program_id(1)

    @pl.when(j == 0)
    def _():
        acc_ref[...] = jnp.zeros_like(acc_ref)

    x = x_ref[...]
    # Standard contraction (no RHS transpose on the MXU path); one dot covers both gate matmuls.
    y = jnp.dot(x, w12_ref[...], preferred_element_type=jnp.float32)  # (tm, 2*th)
    th = y.shape[-1] // 2
    x1 = y[:, :th]
    x2 = y[:, th:]
    h = (x1 * jax.nn.sigmoid(x1)) * x2  # SiLU gate in f32 (VPU/EUP)
    # Partial contribution of this H tile to the final projection, accumulated in f32.
    acc_ref[...] += jnp.dot(
        h.astype(w3_ref.dtype), w3_ref[...], preferred_element_type=jnp.float32
    )

    @pl.when(j == pl.num_programs(1) - 1)
    def _():
        o_ref[...] = acc_ref[...].astype(o_ref.dtype)


def prepare_ffn_weights(w1, w2, w3, th):
    """One-time layout change from torch nn.Linear weights.

    w1, w2 : [H, E]  (torch out x in)     w3 : [E, H]
    Returns (w12_t, w3_t, Hp):
      w12_t : [E, 2*Hp]  columns interleaved per th-tile as [W1^T tile_j | W2^T tile_j]
      w3_t  : [Hp, E]    W3^T, H zero-padded to Hp (multiple of th)
    Zero-padded H rows/cols contribute exactly zero to the output.
    """
    H, E = w1.shape
    Hp = _round_up(H, th)
    pad_h = Hp - H
    w1t = jnp.pad(w1, ((0, pad_h), (0, 0))).T  # [E, Hp]
    w2t = jnp.pad(w2, ((0, pad_h), (0, 0))).T  # [E, Hp]
    w3t = jnp.pad(w3, ((0, 0), (0, pad_h))).T  # [Hp, E]
    n = Hp // th
    w12 = jnp.concatenate([w1t.reshape(E, n, th), w2t.reshape(E, n, th)], axis=2)
    return w12.reshape(E, 2 * Hp), w3t, Hp


def _chip_config():
    """Per-generation tiling / scoped-VMEM defaults (VMEM capacity as discriminator)."""
    vmem_cap = 128 * _MIB
    try:
        info = pltpu.get_tpu_info()
        cap = getattr(info, "vmem_capacity_bytes", None)
        if cap:
            vmem_cap = int(cap)
    except Exception:
        pass
    if vmem_cap <= 64 * _MIB:
        # v7x-class: 64 MiB/TC, 2 TCs -> keep >=2 row tiles, stay well under physical VMEM.
        return dict(tm=512, th=256, vmem_limit_bytes=48 * _MIB, min_m_tiles=2)
    # v5e / v6e class: 128 MiB VMEM, single TensorCore.
    return dict(tm=768, th=512, vmem_limit_bytes=100 * _MIB, min_m_tiles=1)


def feed_forward(x, w1, w2, w3, *, tm=None, th=None, vmem_limit_bytes=None,
                 min_m_tiles=None, compute_dtype=None):
    """SwiGLU FFN matching torch: final(silu(l1(x)) * l2(x)).

    x       : [B, S, E]
    w1, w2  : [H, E]   (torch nn.Linear weight layout, out x in)
    w3      : [E, H]
    compute_dtype : optional (e.g. jnp.bfloat16) cast of x/weights for ~2x MXU rate;
                    the accumulator and SiLU gate stay f32 (outputs deviate slightly from f32 ref).
    Returns : [B, S, E]
    """
    cfg = _chip_config()
    tm = cfg["tm"] if tm is None else tm
    th = cfg["th"] if th is None else th
    vmem_limit_bytes = cfg["vmem_limit_bytes"] if vmem_limit_bytes is None else vmem_limit_bytes
    min_m_tiles = cfg["min_m_tiles"] if min_m_tiles is None else min_m_tiles

    if compute_dtype is not None:
        x = x.astype(compute_dtype)
        w1 = w1.astype(compute_dtype)
        w2 = w2.astype(compute_dtype)
        w3 = w3.astype(compute_dtype)

    B, S, E = x.shape
    H = w1.shape[0]
    M = B * S

    # Hidden-dim tile: multiple of 128, <= requested; H gets zero-padded to a multiple of th.
    th = max(128, min((th // 128) * 128, _round_up(H, 128)))

    # Row tile: 8-aligned, never larger than the row count; split into >= min_m_tiles tiles so a
    # multi-TensorCore chip can shard the 'parallel' axis.
    tm = _round_up(min(tm, _round_up(M, 8)), 8)
    if min_m_tiles > 1 and M > 8:
        tm = min(tm, _round_up(pl.cdiv(M, min_m_tiles), 8))

    # Keep the (double-buffered) footprint inside the scoped-VMEM budget.
    in_bytes = jnp.dtype(x.dtype).itemsize

    def _vmem_est(tm_, th_):
        return (2 * 2 * tm_ * E * in_bytes            # x + out tiles, double-buffered
                + tm_ * E * 4                          # f32 accumulator scratch
                + (2 * 2 * th_ * E + 2 * th_ * E) * in_bytes)  # w12 + w3 tiles, double-buffered

    while _vmem_est(tm, th) > 0.85 * vmem_limit_bytes and tm > 128:
        tm = _round_up(tm // 2, 8)
    while _vmem_est(tm, th) > 0.85 * vmem_limit_bytes and th > 128:
        th = max(128, ((th // 2) // 128) * 128)

    # TODO(synk): in a real model, hoist prepare_ffn_weights to parameter-load time (one-time cost).
    w12_t, w3_t, Hp = prepare_ffn_weights(w1, w2, w3, th)

    Mp = _round_up(M, tm)
    x2d = x.reshape(M, E)
    if Mp != M:
        # Zero rows produce zero outputs; sliced off after the call.
        x2d = jnp.pad(x2d, ((0, Mp - M), (0, 0)))

    n_m, n_h = Mp // tm, Hp // th
    grid = (n_m, n_h)  # (rows [parallel], hidden reduction [arbitrary])

    cost = pl.CostEstimate(
        flops=6 * M * H * E,
        transcendentals=M * H,
        bytes_accessed=int(2 * M * E * in_bytes + 3 * H * E * in_bytes * n_m),
    )

    out2d = pl.pallas_call(
        _ffn_kernel,
        out_shape=jax.ShapeDtypeStruct((Mp, E), x.dtype),
        grid_spec=pltpu.PrefetchScalarGridSpec(
            num_scalar_prefetch=0,
            grid=grid,
            in_specs=[
                pl.BlockSpec((tm, E), lambda i, j: (i, 0)),       # x rows (resident over j)
                pl.BlockSpec((E, 2 * th), lambda i, j: (0, j)),   # packed [W1^T | W2^T] H-tile
                pl.BlockSpec((th, E), lambda i, j: (j, 0)),       # W3^T H-tile
            ],
            out_specs=pl.BlockSpec((tm, E), lambda i, j: (i, 0)),
            scratch_shapes=[pltpu.VMEM((tm, E), jnp.float32)],
        ),
        compiler_params=pltpu.CompilerParams(
            dimension_semantics=("parallel", "arbitrary"),
            vmem_limit_bytes=vmem_limit_bytes,
        ),
        cost_estimate=cost,
    )(x2d, w12_t, w3_t)

    if Mp != M:
        out2d = out2d[:M]
    return out2d.reshape(B, S, E)


def _reference(x, w1, w2, w3):
    x1 = jnp.einsum("bse,he->bsh", x, w1)
    x2 = jnp.einsum("bse,he->bsh", x, w2)
    h = jax.nn.silu(x1) * x2
    return jnp.einsum("bsh,eh->bse", h, w3)


if __name__ == "__main__":
    B, S, E = 2, 8, 32
    widening = 4
    H = E * widening  # 128

    key = jax.random.PRNGKey(0)
    kx, k1, k2, k3 = jax.random.split(key, 4)

    x = jax.random.normal(kx, (B, S, E), dtype=jnp.float32)
    # torch Linear(in, out, bias=False) -> weight [out, in]
    scale = 0.05
    w1 = scale * jax.random.normal(k1, (H, E), dtype=jnp.float32)  # l1.weight
    w2 = scale * jax.random.normal(k2, (H, E), dtype=jnp.float32)  # l2.weight
    w3 = scale * jax.random.normal(k3, (E, H), dtype=jnp.float32)  # final.weight

    out = jax.block_until_ready(feed_forward(x, w1, w2, w3))

    ref = _reference(x, w1, w2, w3)
    assert out.shape == (B, S, E)
    assert jnp.allclose(out, ref, atol=1e-5, rtol=1e-5), "mismatch vs reference"

    print("KERNEL_OK")
</pallas_src>

<mosaic_0001>
module attributes {stable_mosaic.version = 11 : i64} {
  func.func @_ffn_kernel(%arg0: i32, %arg1: i32, %arg2: memref<16x32xf32, #tpu.memory_space<vmem>>, %arg3: memref<32x256xf32, #tpu.memory_space<vmem>>, %arg4: memref<128x32xf32, #tpu.memory_space<vmem>>, %arg5: memref<16x32xf32, #tpu.memory_space<vmem>>, %arg6: memref<16x32xf32, #tpu.memory_space<vmem>>) attributes {dimension_semantics = [#tpu.dimension_semantics<parallel>, #tpu.dimension_semantics<arbitrary>], iteration_bounds = array<i64: 1, 1>, scalar_prefetch = 0 : i64, scratch_operands = 1 : i64, tpu.core_type = #tpu.core_type<tc>, window_params = [{transform_indices = @transform_0, window_bounds = array<i64: 16, 32>}, {transform_indices = @transform_1, window_bounds = array<i64: 32, 256>}, {transform_indices = @transform_2, window_bounds = array<i64: 128, 32>}, {transform_indices = @transform_3, window_bounds = array<i64: 16, 32>}]} {
    %c0_i32 = arith.constant 0 : i32
    %0 = arith.cmpi eq, %arg1, %c0_i32 : i32
    %1 = arith.extui %0 : i1 to i32
    %c0_i32_0 = arith.constant 0 : i32
    %2 = arith.cmpi ne, %1, %c0_i32_0 : i32
    scf.if %2 {
      %cst_14 = arith.constant 0.000000e+00 : f32
      %23 = vector.broadcast %cst_14 : f32 to vector<16x32xf32>
      %c0_15 = arith.constant 0 : index
      %c0_16 = arith.constant 0 : index
      %24 = vector.load %arg6[%c0_15, %c0_16] : memref<16x32xf32, #tpu.memory_space<vmem>>, vector<16x32xf32>
      tpu.vector_store %arg6[%c0_15, %c0_16], %23 {strides = array<i32>} : memref<16x32xf32, #tpu.memory_space<vmem>>, vector<16x32xf32>,
    } else {
    }
    %c0 = arith.constant 0 : index
    %c0_1 = arith.constant 0 : index
    %3 = vector.load %arg2[%c0, %c0_1] : memref<16x32xf32, #tpu.memory_space<vmem>>, vector<16x32xf32>
    %c0_2 = arith.constant 0 : index
    %c0_3 = arith.constant 0 : index
    %4 = vector.load %arg3[%c0_2, %c0_3] : memref<32x256xf32, #tpu.memory_space<vmem>>, vector<32x256xf32>
    %cst = arith.constant dense<0.000000e+00> : vector<16x256xf32>
    %5 = tpu.matmul %3, %4, %cst {dimension_numbers = #tpu.dot_dimension_numbers<[1], [0], [0], [1], [0, 0, 1, 1], [], []>} : vector<16x32xf32>, vector<32x256xf32>, vector<16x256xf32> -> vector<16x256xf32>
    %6 = vector.extract_strided_slice %5 {offsets = [0, 0], sizes = [16, 128], strides = [1, 1]} : vector<16x256xf32> to vector<16x128xf32>
    %7 = vector.extract_strided_slice %5 {offsets = [0, 128], sizes = [16, 128], strides = [1, 1]} : vector<16x256xf32> to vector<16x128xf32>
    %8 = arith.negf %6 : vector<16x128xf32>
    %9 = math.exp %8 : vector<16x128xf32>
    %cst_4 = arith.constant 1.000000e+00 : f32
    %10 = vector.broadcast %cst_4 : f32 to vector<16x128xf32>
    %11 = arith.addf %10, %9 : vector<16x128xf32>
    %12 = arith.divf %10, %11 : vector<16x128xf32>
    %13 = arith.mulf %6, %12 : vector<16x128xf32>
    %14 = arith.mulf %13, %7 : vector<16x128xf32>
    %c0_5 = arith.constant 0 : index
    %c0_6 = arith.constant 0 : index
    %15 = vector.load %arg6[%c0_5, %c0_6] : memref<16x32xf32, #tpu.memory_space<vmem>>, vector<16x32xf32>
    %c0_7 = arith.constant 0 : index
    %c0_8 = arith.constant 0 : index
    %16 = vector.load %arg4[%c0_7, %c0_8] : memref<128x32xf32, #tpu.memory_space<vmem>>, vector<128x32xf32>
    %cst_9 = arith.constant dense<0.000000e+00> : vector<16x32xf32>
    %17 = tpu.matmul %14, %16, %cst_9 {dimension_numbers = #tpu.dot_dimension_numbers<[1], [0], [0], [1], [0, 0, 1, 1], [], []>} : vector<16x128xf32>, vector<128x32xf32>, vector<16x32xf32> -> vector<16x32xf32>
    %18 = arith.addf %15, %17 : vector<16x32xf32>
    %c0_10 = arith.constant 0 : index
    %c0_11 = arith.constant 0 : index
    %19 = vector.load %arg6[%c0_10, %c0_11] : memref<16x32xf32, #tpu.memory_space<vmem>>, vector<16x32xf32>
    tpu.vector_store %arg6[%c0_10, %c0_11], %18 {strides = array<i32>} : memref<16x32xf32, #tpu.memory_space<vmem>>, vector<16x32xf32>,
    %c0_i32_12 = arith.constant 0 : i32
    %20 = arith.cmpi eq, %arg1, %c0_i32_12 : i32
    %21 = arith.extui %20 : i1 to i32
    %c0_i32_13 = arith.constant 0 : i32
    %22 = arith.cmpi ne, %21, %c0_i32_13 : i32
    scf.if %22 {
      %c0_14 = arith.constant 0 : index
      %c0_15 = arith.constant 0 : index
      %23 = vector.load %arg6[%c0_14, %c0_15] : memref<16x32xf32, #tpu.memory_space<vmem>>, vector<16x32xf32>
      %c0_16 = arith.constant 0 : index
      %c0_17 = arith.constant 0 : index
      %24 = vector.load %arg5[%c0_16, %c0_17] : memref<16x32xf32, #tpu.memory_space<vmem>>, vector<16x32xf32>
      tpu.vector_store %arg5[%c0_16, %c0_17], %23 {strides = array<i32>} : memref<16x32xf32, #tpu.memory_space<vmem>>, vector<16x32xf32>,
    } else {
    }
    return
  }
  func.func @transform_0(%arg0: i32, %arg1: i32) -> (i32, i32) {
    %c0_i32 = arith.constant 0 : i32
    %c0_i32_0 = arith.constant 0 : i32
    return %arg0, %c0_i32 : i32, i32
  }
  func.func @transform_1(%arg0: i32, %arg1: i32) -> (i32, i32) {
    %c0_i32 = arith.constant 0 : i32
    %c0_i32_0 = arith.constant 0 : i32
    return %c0_i32, %arg1 : i32, i32
  }
  func.func @transform_2(%arg0: i32, %arg1: i32) -> (i32, i32) {
    %c0_i32 = arith.constant 0 : i32
    %c0_i32_0 = arith.constant 0 : i32
    return %arg1, %c0_i32 : i32, i32
  }
  func.func @transform_3(%arg0: i32, %arg1: i32) -> (i32, i32) {
    %c0_i32 = arith.constant 0 : i32
    %c0_i32_0 = arith.constant 0 : i32
    return %arg0, %c0_i32 : i32, i32
  }
}

</mosaic_0001>

<llo_original>
// kernel: tpu_custom_call.1
$region0: #{tpu_custom_call.1}
  #allocation0 [shape = 'u32[]', space=smem, size = 0x4, offset = 0x4, fixed_abs, tag = 'smem constant byte address 0x4 - core index']
  #allocation1 [shape = 'u32[144,128]{1,0:T(1,128)}', space=vmem, size = 0x12000, scoped, tag = 'internal scratch']
  #allocation2 [shape = 'f32[16,32]{1,0:T(8,128)}', space=vmem, size = 0x2000, scoped, tag = 'scratch operand']
  %s0 = inlined_call_operand.hbm [shape: f32[16,32], index: 0, kind: input, shape index: {}]
  %s1 = inlined_call_operand.hbm [shape: f32[32,256], index: 1, kind: input, shape index: {}]
  %s2 = inlined_call_operand.hbm [shape: f32[128,32], index: 2, kind: input, shape index: {}]
  %s3 = inlined_call_operand.hbm [shape: f32[16,32], index: 3, kind: output, shape index: {}]
  %s4 = sld [smem:[#allocation0]]
  $region42: #{tpu_custom_call.1} parent=0
    _
  %s6 = ssub.s32 1, %s4
  %s7 = scalar_select 0, %s6, %s4
  $region1: #{tpu_custom_call.1} parent=0
    #allocation3 [shape = 'u8[8192]{0}', space=vmem, size = 0x2000, scoped, tag = 'input window, operand 0, single buffered']
    #allocation4 [shape = 's32[1]{0}', space=sflag, size = 0x4, scoped, tag = 'scoped memory for tpu_custom_call.1']
    #allocation5 [shape = 's32[1]{0}', space=sflag, size = 0x4, scoped, tag = 'scoped memory for tpu_custom_call.1']
    #allocation6 [shape = 'u8[32768]{0}', space=vmem, size = 0x8000, scoped, tag = 'input window, operand 1, single buffered']
    #allocation7 [shape = 's32[1]{0}', space=sflag, size = 0x4, scoped, tag = 'scoped memory for tpu_custom_call.1']
    #allocation8 [shape = 'u8[65536]{0}', space=vmem, size = 0x10000, scoped, tag = 'input window, operand 2, single buffered']
    #allocation9 [shape = 'u8[8192]{0}', space=vmem, size = 0x2000, scoped, tag = 'output window, operand 0, single buffered']
    %8 = vsyncpa [#allocation4], 0
    %9 = vsyncpa [#allocation7], 0
    %10 = vsyncpa [#allocation5], 0
    // Predicated region
    $region2: #{tpu_custom_call.1} parent=1 // pred_check
      _
    $region3: #{tpu_custom_call.1} parent=1 // pred_check_branch
      %12 = sbr.rel (0) target = $region5
    $region4: #{tpu_custom_call.1} parent=1 // pred_region
      %s14 = ssub.s32 256, 256
      %15 = vsyncadd [#allocation4], %s14
      %s16 = sshll.u32 [#allocation3], 4
      %s17 = int_to_ptr.vmem [resolvable:$true] %s16
      %22 = dma.hbm_to_vmem [thread:$0]  %s0, 256, %s17, [#allocation4], 128, 128, 8
    $region5: #{tpu_custom_call.1} parent=1 // pred_fallthru
      _
    // Predicated region
    $region6: #{tpu_custom_call.1} parent=1 // pred_check
      _
    $region7: #{tpu_custom_call.1} parent=1 // pred_check_branch
      %24 = sbr.rel (0) target = $region9
    $region8: #{tpu_custom_call.1} parent=1 // pred_region
      %s26 = ssub.s32 1024, 1024
      %27 = vsyncadd [#allocation7], %s26
      %s28 = sshll.u32 [#allocation6], 4
      %s29 = int_to_ptr.vmem [resolvable:$true] %s28
      %34 = dma.hbm_to_vmem [thread:$0]  %s1, 1024, %s29, [#allocation7], 256, 256, 16
    $region9: #{tpu_custom_call.1} parent=1 // pred_fallthru
      _
    // Predicated region
    $region10: #{tpu_custom_call.1} parent=1 // pred_check
      _
    $region11: #{tpu_custom_call.1} parent=1 // pred_check_branch
      %36 = sbr.rel (0) target = $region13
    $region12: #{tpu_custom_call.1} parent=1 // pred_region
      %s38 = ssub.s32 2048, 2048
      %39 = vsyncadd [#allocation7], %s38
      %s40 = sshll.u32 [#allocation8], 4
      %s41 = int_to_ptr.vmem [resolvable:$true] %s40
      %46 = dma.hbm_to_vmem [thread:$0]  %s2, 2048, %s41, [#allocation7], 128, 128, 8
    $region13: #{tpu_custom_call.1} parent=1 // pred_fallthru
      _
    // Predicated region
    $region14: #{tpu_custom_call.1} parent=1 // pred_check
      _
    $region15: #{tpu_custom_call.1} parent=1 // pred_check_branch
      %48 = sbr.rel (0) target = $region17
    $region16: #{tpu_custom_call.1} parent=1 // pred_region
      %49 = dma.done [#allocation4], 256
    $region17: #{tpu_custom_call.1} parent=1 // pred_fallthru
      _
    // Predicated region
    $region18: #{tpu_custom_call.1} parent=1 // pred_check
      _
    $region19: #{tpu_custom_call.1} parent=1 // pred_check_branch
      %51 = sbr.rel (0) target = $region21
    $region20: #{tpu_custom_call.1} parent=1 // pred_region
      %52 = dma.done [#allocation7], 1024
    $region21: #{tpu_custom_call.1} parent=1 // pred_fallthru
      _
    // Predicated region
    $region22: #{tpu_custom_call.1} parent=1 // pred_check
      _
    $region23: #{tpu_custom_call.1} parent=1 // pred_check_branch
      %54 = sbr.rel (0) target = $region25
    $region24: #{tpu_custom_call.1} parent=1 // pred_region
      %55 = dma.done [#allocation7], 2048
    $region25: #{tpu_custom_call.1} parent=1 // pred_fallthru
      _
    %p56 = scmp.eq.s32.totalorder 0, 0
    // Predicated region
    $region26: #{tpu_custom_call.1} parent=1 // pred_check
      %p57 = pneg %p56
    $region27: #{tpu_custom_call.1} parent=1 // pred_check_branch
      %59 = sbr.rel (%p57) target = $region29
    $region28: #{tpu_custom_call.1} parent=1 // pred_region
      %vm60 = vcmask 261120
      %61 = vst.msk [vmem:[#allocation2] sm:$0xff] %vm60, 0.0
      %62 = vst.msk [vmem:[#allocation2 + $0x8] sm:$0xff] %vm60, 0.0
    $region29: #{tpu_custom_call.1} parent=1 // pred_fallthru
      _
    %v63 = vld [vmem:[#allocation3] sm:$0xff]
    %v64 = vld [vmem:[#allocation3 + $0x8] sm:$0xff]
    %v65 = vld [vmem:[#allocation6] sm:$0xff]
    %v66 = vld [vmem:[#allocation6 + $0x8] sm:$0xff]
    %v67 = vld [vmem:[#allocation6 + $0x10] sm:$0xff]
    %v68 = vld [vmem:[#allocation6 + $0x18] sm:$0xff]
    %v69 = vld [vmem:[#allocation6 + $0x20] sm:$0xff]
    %v70 = vld [vmem:[#allocation6 + $0x28] sm:$0xff]
    %v71 = vld [vmem:[#allocation6 + $0x30] sm:$0xff]
    %v72 = vld [vmem:[#allocation6 + $0x38] sm:$0xff]
    %vm73 = vcmask 261120
    %v75 = vsel %vm73, %v63, 0
    %v78 = vsel %vm73, %v64, 0
    %80 = vmatprep.subr.mxu0 %v66
    %81 = vmatpush1.msra.mxu0 %v65
    %82 = vmatprep.subr.mxu0 %v68
    %83 = vmatpush1.msra.mxu0 %v67
    %84 = vmatprep.subr.mxu0 %v70
    %85 = vmatpush1.msra.mxu0 %v69
    %86 = vmatprep.subr.mxu0 %v72
    %87 = vmatpush1.msra.mxu0 %v71
    %88 = vmatprep.subr.mxu0 0.0
    %89 = vmatpush1.msra.mxu0 0.0
    %90 = vmatprep.subr.mxu0 0.0
    %91 = vmatpush1.msra.mxu0 0.0
    %92 = vmatprep.subr.mxu0 0.0
    %93 = vmatpush1.msra.mxu0 0.0
    %94 = vmatprep.subr.mxu0 0.0
    %95 = vmatpush1.msra.mxu0 0.0
    %96 = vmatprep.subr.mxu0 0.0
    %97 = vmatpush1.msra.mxu0 0.0
    %98 = vmatprep.subr.mxu0 0.0
    %99 = vmatpush1.msra.mxu0 0.0
    %100 = vmatprep.subr.mxu0 0.0
    %101 = vmatpush1.msra.mxu0 0.0
    %102 = vmatprep.subr.mxu0 0.0
    %103 = vmatpush1.msra.mxu0 0.0
    %104 = vmatprep.subr.mxu0 0.0
    %105 = vmatpush1.msra.mxu0 0.0
    %106 = vmatprep.subr.mxu0 0.0
    %107 = vmatpush1.msra.mxu0 0.0
    %108 = vmatprep.subr.mxu0 0.0
    %109 = vmatpush1.msra.mxu0 0.0
    %110 = vmatprep.subr.mxu0 0.0
    %111 = vmatpush1.msra.mxu0 0.0
    %112 = vmatprep.subr.mxu0 0.0
    %113 = vmatpush1.msra.mxu0 0.0
    %114 = vmatprep.subr.mxu0 0.0
    %115 = vmatpush1.msra.mxu0 0.0
    %116 = vmatprep.subr.mxu0 0.0
    %117 = vmatpush1.msra.mxu0 0.0
    %118 = vmatprep.subr.mxu0 0.0
    %119 = vmatpush1.msra.mxu0 0.0
    %120 = vmatprep.subr.mxu0 0.0
    %121 = vmatpush1.msra.mxu0 0.0
    %122 = vmatprep.subr.mxu0 0.0
    %123 = vmatpush1.msra.mxu0 0.0
    %124 = vmatprep.subr.mxu0 0.0
    %125 = vmatpush1.msra.mxu0 0.0
    %126 = vmatprep.subr.mxu0 0.0
    %127 = vmatpush1.msra.mxu0 0.0
    %128 = vmatprep.subr.mxu0 0.0
    %129 = vmatpush1.msra.mxu0 0.0
    %130 = vmatprep.subr.mxu0 0.0
    %131 = vmatpush1.msra.mxu0 0.0
    %132 = vmatprep.subr.mxu0 0.0
    %133 = vmatpush1.msra.mxu0 0.0
    %134 = vmatprep.subr.mxu0 0.0
    %135 = vmatpush1.msra.mxu0 0.0
    %136 = vmatprep.subr.mxu0 0.0
    %137 = vmatpush1.msra.mxu0 0.0
    %138 = vmatprep.subr.mxu0 0.0
    %139 = vmatpush1.msra.mxu0 0.0
    %140 = vmatprep.subr.mxu0 0.0
    %141 = vmatpush1.msra.mxu0 0.0
    %142 = vmatprep.subr.mxu0 0.0
    %143 = vmatpush1.msra.mxu0 0.0
    %144 = vmatprep.mubr.f32.mxu0 0.0
    %145 = vmatmul.mubr.f32.gmra.mrb[0].mxu0 %v75
    %v146 = vpop.f32.mrb[0].mxu0
    %v147 = vadd.f32 0.0, %v146
    %v148 = vpop.f32.mrb[0].mxu0
    %v149 = vadd.f32 0.0, %v148
    %150 = vmatprep.mubr.f32.mxu0 0.0
    %151 = vmatmul.mubr.f32.gmra.mrb[0].mxu0 %v78
    %v152 = vpop.f32.mrb[0].mxu0
    %v153 = vadd.f32 0.0, %v152
    %v154 = vpop.f32.mrb[0].mxu0
    %v155 = vadd.f32 0.0, %v154
    %156 = vdwg.mxu0
    %v157 = vxor.u32 %v147, 2147483648
    %v158 = vxor.u32 %v153, 2147483648
    %v159 = vmul.f32 %v157, 1.442695
    %v160 = vpow.pop %v159
    %v161 = vmul.f32 %v158, 1.442695
    %v162 = vpow.pop %v161
    %v163 = vadd.f32 %v160, 1.0
    %v164 = vadd.f32 %v162, 1.0
    %v165 = vrcp.pop %v163
    %v166 = vmul.f32 1.0, %v165
    %v167 = vrcp.pop %v164
    %v168 = vmul.f32 1.0, %v167
    %v169 = vmul.f32 %v147, %v166
    %v170 = vmul.f32 %v153, %v168
    %v171 = vmul.f32 %v169, %v149
    %v172 = vmul.f32 %v170, %v155
    %v173 = vld [vmem:[#allocation2] sm:$0xff]
    %v174 = vld [vmem:[#allocation2 + $0x8] sm:$0xff]
    %v175 = vld [vmem:[#allocation8] sm:$0xff]
    %v176 = vld [vmem:[#allocation8 + $0x8] sm:$0xff]
    %v177 = vld [vmem:[#allocation8 + $0x10] sm:$0xff]
    %v178 = vld [vmem:[#allocation8 + $0x18] sm:$0xff]
    %v179 = vld [vmem:[#allocation8 + $0x20] sm:$0xff]
    %v180 = vld [vmem:[#allocation8 + $0x28] sm:$0xff]
    %v181 = vld [vmem:[#allocation8 + $0x30] sm:$0xff]
    %v182 = vld [vmem:[#allocation8 + $0x38] sm:$0xff]
    %v183 = vld [vmem:[#allocation8 + $0x40] sm:$0xff]
    %v184 = vld [vmem:[#allocation8 + $0x48] sm:$0xff]
    %v185 = vld [vmem:[#allocation8 + $0x50] sm:$0xff]
    %v186 = vld [vmem:[#allocation8 + $0x58] sm:$0xff]
    %v187 = vld [vmem:[#allocation8 + $0x60] sm:$0xff]
    %v188 = vld [vmem:[#allocation8 + $0x68] sm:$0xff]
    %v189 = vld [vmem:[#allocation8 + $0x70] sm:$0xff]
    %v190 = vld [vmem:[#allocation8 + $0x78] sm:$0xff]
    %191 = vmatprep.subr.mxu0 0.0
    %192 = vmatpush1.msra.mxu0 %v175
    %193 = vmatprep.subr.mxu0 0.0
    %194 = vmatpush1.msra.mxu0 %v176
    %195 = vmatprep.subr.mxu0 0.0
    %196 = vmatpush1.msra.mxu0 %v177
    %197 = vmatprep.subr.mxu0 0.0
    %198 = vmatpush1.msra.mxu0 %v178
    %199 = vmatprep.subr.mxu0 0.0
    %200 = vmatpush1.msra.mxu0 %v179
    %201 = vmatprep.subr.mxu0 0.0
    %202 = vmatpush1.msra.mxu0 %v180
    %203 = vmatprep.subr.mxu0 0.0
    %204 = vmatpush1.msra.mxu0 %v181
    %205 = vmatprep.subr.mxu0 0.0
    %206 = vmatpush1.msra.mxu0 %v182
    %207 = vmatprep.subr.mxu0 0.0
    %208 = vmatpush1.msra.mxu0 %v183
    %209 = vmatprep.subr.mxu0 0.0
    %210 = vmatpush1.msra.mxu0 %v184
    %211 = vmatprep.subr.mxu0 0.0
    %212 = vmatpush1.msra.mxu0 %v185
    %213 = vmatprep.subr.mxu0 0.0
    %214 = vmatpush1.msra.mxu0 %v186
    %215 = vmatprep.subr.mxu0 0.0
    %216 = vmatpush1.msra.mxu0 %v187
    %217 = vmatprep.subr.mxu0 0.0
    %218 = vmatpush1.msra.mxu0 %v188
    %219 = vmatprep.subr.mxu0 0.0
    %220 = vmatpush1.msra.mxu0 %v189
    %221 = vmatprep.subr.mxu0 0.0
    %222 = vmatpush1.msra.mxu0 %v190
    %223 = vmatprep.subr.mxu0 0.0
    %224 = vmatpush1.msra.mxu0 0.0
    %225 = vmatprep.subr.mxu0 0.0
    %226 = vmatpush1.msra.mxu0 0.0
    %227 = vmatprep.subr.mxu0 0.0
    %228 = vmatpush1.msra.mxu0 0.0
    %229 = vmatprep.subr.mxu0 0.0
    %230 = vmatpush1.msra.mxu0 0.0
    %231 = vmatprep.subr.mxu0 0.0
    %232 = vmatpush1.msra.mxu0 0.0
    %233 = vmatprep.subr.mxu0 0.0
    %234 = vmatpush1.msra.mxu0 0.0
    %235 = vmatprep.subr.mxu0 0.0
    %236 = vmatpush1.msra.mxu0 0.0
    %237 = vmatprep.subr.mxu0 0.0
    %238 = vmatpush1.msra.mxu0 0.0
    %239 = vmatprep.subr.mxu0 0.0
    %240 = vmatpush1.msra.mxu0 0.0
    %241 = vmatprep.subr.mxu0 0.0
    %242 = vmatpush1.msra.mxu0 0.0
    %243 = vmatprep.subr.mxu0 0.0
    %244 = vmatpush1.msra.mxu0 0.0
    %245 = vmatprep.subr.mxu0 0.0
    %246 = vmatpush1.msra.mxu0 0.0
    %247 = vmatprep.subr.mxu0 0.0
    %248 = vmatpush1.msra.mxu0 0.0
    %249 = vmatprep.subr.mxu0 0.0
    %250 = vmatpush1.msra.mxu0 0.0
    %251 = vmatprep.subr.mxu0 0.0
    %252 = vmatpush1.msra.mxu0 0.0
    %253 = vmatprep.subr.mxu0 0.0
    %254 = vmatpush1.msra.mxu0 0.0
    %255 = vmatprep.mubr.f32.mxu0 0.0
    %256 = vmatmul.mubr.f32.gmra.mrb[0].mxu0 %v171
    %v257 = vpop.f32.mrb[0].mxu0
    %v258 = vadd.f32 0.0, %v257
    %v259 = vpop.f32.mrb[0].mxu0
    %260 = vmatprep.mubr.f32.mxu0 0.0
    %261 = vmatmul.mubr.f32.gmra.mrb[0].mxu0 %v172
    %v262 = vpop.f32.mrb[0].mxu0
    %v263 = vadd.f32 0.0, %v262
    %v264 = vpop.f32.mrb[0].mxu0
    %265 = vdwg.mxu0
    %v266 = vadd.f32 %v173, %v258
    %v267 = vadd.f32 %v174, %v263
    %268 = vst.msk [vmem:[#allocation2] sm:$0xff] %vm73, %v266
    %269 = vst.msk [vmem:[#allocation2 + $0x8] sm:$0xff] %vm73, %v267
    // Predicated region
    $region30: #{tpu_custom_call.1} parent=1 // pred_check
      %p270 = pneg %p56
    $region31: #{tpu_custom_call.1} parent=1 // pred_check_branch
      %272 = sbr.rel (%p270) target = $region33
    $region32: #{tpu_custom_call.1} parent=1 // pred_region
      %v273 = vld [vmem:[#allocation2] sm:$0xff]
      %v274 = vld [vmem:[#allocation2 + $0x8] sm:$0xff]
      %275 = vst.msk [vmem:[#allocation9] sm:$0xff] %vm73, %v273
      %276 = vst.msk [vmem:[#allocation9 + $0x8] sm:$0xff] %vm73, %v274
    $region33: #{tpu_custom_call.1} parent=1 // pred_fallthru
      _
    // Predicated region
    $region34: #{tpu_custom_call.1} parent=1 // pred_check
      _
    $region35: #{tpu_custom_call.1} parent=1 // pred_check_branch
      %278 = sbr.rel (0) target = $region37
    $region36: #{tpu_custom_call.1} parent=1 // pred_region
      %s280 = ssub.s32 256, 256
      %281 = vsyncadd [#allocation5], %s280
      %s282 = sshll.u32 [#allocation9], 4
      %s283 = int_to_ptr.vmem [resolvable:$true] %s282
      %288 = dma.vmem_to_hbm [thread:$0]  %s283, 256, %s3, [#allocation5], 128, 128, 8
    $region37: #{tpu_custom_call.1} parent=1 // pred_fallthru
      _
    // Predicated region
    $region38: #{tpu_custom_call.1} parent=1 // pred_check
      _
    $region39: #{tpu_custom_call.1} parent=1 // pred_check_branch
      %290 = sbr.rel (0) target = $region41
    $region40: #{tpu_custom_call.1} parent=1 // pred_region
      %291 = dma.done [#allocation5], 256
    $region41: #{tpu_custom_call.1} parent=1 // pred_fallthru
      _
    %292 = vsyncpa [#allocation4], 1
    %293 = vsyncpa [#allocation7], 1
    %294 = vsyncpa [#allocation5], 1

</llo_original>
